<compile_context>
chip_gen: v6e
topology: v6e:2x2x1
jax: 0.10.0
libtpu: 0.0.40
codegen_flags: <defaults>
</compile_context>

<pallas_src>
import numpy as np
import jax
import jax.numpy as jnp
from jax.experimental import pallas as pl
from jax.experimental.pallas import tpu as pltpu


# ----------------------------------------------------------------------------
# Parameter / operator setup (host-side numpy, same math as the PyTorch module)
# ----------------------------------------------------------------------------
def unitary_dilation_operator(A: np.ndarray, t: float) -> np.ndarray:
    """Replicates QuantumGCNExtended.unitary_dilation_operator; returns U[:N,:N]
    cast to float32 (torch.tensor(complex, dtype=float32) discards imag)."""
    A = np.asarray(A, dtype=np.float64)
    # A is symmetric -> -1j*A*t is skew-Hermitian; expm via eigh is stable.
    w, V = np.linalg.eigh(A)
    G_t = (V * np.exp(-1j * w * t)) @ V.conj().T

    G_dagger = G_t.conj().T
    eigenvalues = np.linalg.eigvals(G_t @ G_dagger)
    sqrt_max_eigenvalue = np.sqrt(np.max(eigenvalues.real))
    Left_top = G_t / sqrt_max_eigenvalue
    # U = [[Left_top, Right_top], [Left_low, Right_low]]; U[:N,:N] == Left_top.
    return np.real(Left_top).astype(np.float32)


# ----------------------------------------------------------------------------
# Pallas kernel: relu( G @ (x @ W^T) + b )   for a block of Bt graphs per step
# ----------------------------------------------------------------------------
def _qgcn_kernel(g_ref, x_ref, w_ref, b_ref, o_ref):
    # g_ref: (N, N)         propagation operator (grid-invariant, resident)
    # x_ref: (Bt, N, Fin)   node features for Bt graphs
    # w_ref: (Fin, Fout)    fc weight, transposed (resident)
    # b_ref: (1, Fout)      fc bias (resident)
    # o_ref: (Bt, N, Fout)  output tile
    Bt, N, Fin = x_ref.shape
    Fout = w_ref.shape[1]

    g = g_ref[...]
    w = w_ref[...]
    bias = b_ref[...]

    # fc as ONE (Bt*N, Fin) @ (Fin, Fout) dot: folds the batch into the MXU
    # row dimension (good sublane fill vs. per-graph 8-row matmuls).
    xw = jnp.dot(x_ref[...].reshape(Bt * N, Fin), w,
                 preferred_element_type=jnp.float32)
    xw = xw.reshape(Bt, N, Fout)

    # Per-graph propagation G @ (x_b @ W^T) on the already VMEM-resident xw
    # (== (G @ x_b) @ W^T by associativity).  Bt is small & static -> unroll.
    for i in range(Bt):
        y = jnp.dot(g, xw[i], preferred_element_type=jnp.float32)
        o_ref[i] = jnp.maximum(y + bias, 0.0)


def _default_num_steps(batch: int) -> int:
    """>=2 parallel grid steps only where there are 2 TensorCores (v7x);
    single-TC chips (v5e / v6e) collapse to one step."""
    try:
        kind = jax.devices()[0].device_kind.lower()
    except Exception:
        kind = ""
    if "v7" in kind and batch >= 2 and batch % 2 == 0:
        return 2
    return 1


def quantum_gcn_forward(G_t, x, W, b, *, num_steps=None):
    """Forward pass of QuantumGCNExtended for a batch of graphs.

    G_t: (N, N) f32               propagation operator
    x:   (B, N, Fin) or (N, Fin)  node features
    W:   (Fout, Fin) f32          nn.Linear weight (PyTorch layout)
    b:   (Fout,) f32              nn.Linear bias
    returns: (B, N, Fout) (or (N, Fout) if x was 2-D) f32
    """
    x = jnp.asarray(x, jnp.float32)
    squeeze = (x.ndim == 2)
    if squeeze:
        x = x[None]
    B, N, Fin = x.shape
    Fout = W.shape[0]

    if num_steps is None:
        num_steps = _default_num_steps(B)
    if B % num_steps != 0:
        num_steps = 1
    Bt = B // num_steps

    W_t = jnp.asarray(W, jnp.float32).T            # (Fin, Fout)
    b_r = jnp.asarray(b, jnp.float32).reshape(1, Fout)
    G_t = jnp.asarray(G_t, jnp.float32)

    out = pl.pallas_call(
        _qgcn_kernel,
        out_shape=jax.ShapeDtypeStruct((B, N, Fout), jnp.float32),
        grid=(num_steps,),
        in_specs=[
            pl.BlockSpec((N, N), lambda i: (0, 0)),           # G: resident
            pl.BlockSpec((Bt, N, Fin), lambda i: (i, 0, 0)),  # x block
            pl.BlockSpec((Fin, Fout), lambda i: (0, 0)),      # W^T: resident
            pl.BlockSpec((1, Fout), lambda i: (0, 0)),        # bias: resident
        ],
        out_specs=pl.BlockSpec((Bt, N, Fout), lambda i: (i, 0, 0)),
        compiler_params=pltpu.CompilerParams(
            dimension_semantics=("parallel",),
        ),
    )(G_t, x, W_t, b_r)

    if squeeze:
        out = out[0]
    return out


# ----------------------------------------------------------------------------
# Driver
# ----------------------------------------------------------------------------
if __name__ == "__main__":
    B, N, Fin, Fout = 4, 8, 16, 32
    t = 0.5

    key = jax.random.PRNGKey(0)
    k_a, k_x, k_w, k_b = jax.random.split(key, 4)

    # Deterministic symmetric "adjacency" matrix A.
    A = np.asarray(jax.random.normal(k_a, (N, N), dtype=jnp.float32),
                   dtype=np.float64)
    A = (A + A.T) / 2.0

    # Operator (one-time parameter setup, outside the kernel, like the module).
    G_t = jnp.asarray(unitary_dilation_operator(A, t))          # (N, N) f32

    # Inputs / fc parameters (nn.Linear stores weight as (Fout, Fin)).
    x = jax.random.normal(k_x, (B, N, Fin), dtype=jnp.float32)
    W_pt = jax.random.normal(k_w, (Fout, Fin), dtype=jnp.float32) * 0.1
    b = jax.random.normal(k_b, (Fout,), dtype=jnp.float32) * 0.1

    out = quantum_gcn_forward(G_t, x, W_pt, b)
    out = jax.block_until_ready(out)

    # Pure-JAX f32 reference.  The kernel's dots run at default MXU precision
    # (single bf16 pass) per the perf review, so the tolerance is loosened
    # accordingly (bf16 operand rounding over K<=16 contractions).
    h_ref = jnp.einsum("nm,bmf->bnf", G_t, x,
                       precision=jax.lax.Precision.HIGHEST)
    y_ref = jnp.einsum("bnf,of->bno", h_ref, W_pt,
                       precision=jax.lax.Precision.HIGHEST) + b
    ref = jnp.maximum(y_ref, 0.0)
    np.testing.assert_allclose(np.asarray(out), np.asarray(ref),
                               rtol=5e-2, atol=5e-2)

    print("KERNEL_OK")
</pallas_src>

<mosaic_0001>
module attributes {stable_mosaic.version = 11 : i64} {
  func.func @_qgcn_kernel(%arg0: i32, %arg1: memref<8x8xf32, #tpu.memory_space<vmem>>, %arg2: memref<4x8x16xf32, #tpu.memory_space<vmem>>, %arg3: memref<16x32xf32, #tpu.memory_space<vmem>>, %arg4: memref<1x32xf32, #tpu.memory_space<vmem>>, %arg5: memref<4x8x32xf32, #tpu.memory_space<vmem>>) attributes {dimension_semantics = [#tpu.dimension_semantics<parallel>], iteration_bounds = array<i64: 1>, scalar_prefetch = 0 : i64, scratch_operands = 0 : i64, tpu.core_type = #tpu.core_type<tc>, window_params = [{pipeline_mode = #tpu.pipeline_mode<synchronous>, transform_indices = @transform_0, window_bounds = array<i64: 8, 8>}, {transform_indices = @transform_1, window_bounds = array<i64: 4, 8, 16>}, {pipeline_mode = #tpu.pipeline_mode<synchronous>, transform_indices = @transform_2, window_bounds = array<i64: 16, 32>}, {pipeline_mode = #tpu.pipeline_mode<synchronous>, transform_indices = @transform_3, window_bounds = array<i64: 1, 32>}, {transform_indices = @transform_4, window_bounds = array<i64: 4, 8, 32>}]} {
    %c0 = arith.constant 0 : index
    %c0_0 = arith.constant 0 : index
    %0 = vector.load %arg1[%c0, %c0_0] : memref<8x8xf32, #tpu.memory_space<vmem>>, vector<8x8xf32>
    %c0_1 = arith.constant 0 : index
    %c0_2 = arith.constant 0 : index
    %1 = vector.load %arg3[%c0_1, %c0_2] : memref<16x32xf32, #tpu.memory_space<vmem>>, vector<16x32xf32>
    %c0_3 = arith.constant 0 : index
    %c0_4 = arith.constant 0 : index
    %2 = vector.load %arg4[%c0_3, %c0_4] : memref<1x32xf32, #tpu.memory_space<vmem>>, vector<1x32xf32>
    %c0_5 = arith.constant 0 : index
    %c0_6 = arith.constant 0 : index
    %c0_7 = arith.constant 0 : index
    %3 = vector.load %arg2[%c0_5, %c0_6, %c0_7] : memref<4x8x16xf32, #tpu.memory_space<vmem>>, vector<4x8x16xf32>
    %4 = vector.shape_cast %3 : vector<4x8x16xf32> to vector<32x16xf32>
    %cst = arith.constant dense<0.000000e+00> : vector<32x32xf32>
    %5 = tpu.matmul %4, %1, %cst {dimension_numbers = #tpu.dot_dimension_numbers<[1], [0], [0], [1], [0, 0, 1, 1], [], []>} : vector<32x16xf32>, vector<16x32xf32>, vector<32x32xf32> -> vector<32x32xf32>
    %6 = vector.shape_cast %5 : vector<32x32xf32> to vector<4x8x32xf32>
    %7 = vector.extract_strided_slice %6 {offsets = [0, 0, 0], sizes = [1, 8, 32], strides = [1, 1, 1]} : vector<4x8x32xf32> to vector<1x8x32xf32>
    %8 = vector.shape_cast %7 : vector<1x8x32xf32> to vector<8x32xf32>
    %cst_8 = arith.constant dense<0.000000e+00> : vector<8x32xf32>
    %9 = tpu.matmul %0, %8, %cst_8 {dimension_numbers = #tpu.dot_dimension_numbers<[1], [0], [0], [1], [0, 0, 1, 1], [], []>} : vector<8x8xf32>, vector<8x32xf32>, vector<8x32xf32> -> vector<8x32xf32>
    %10 = vector.broadcast %2 : vector<1x32xf32> to vector<8x32xf32>
    %11 = arith.addf %9, %10 : vector<8x32xf32>
    %cst_9 = arith.constant 0.000000e+00 : f32
    %12 = vector.broadcast %cst_9 : f32 to vector<8x32xf32>
    %13 = arith.maximumf %11, %12 : vector<8x32xf32>
    %c0_10 = arith.constant 0 : index
    %c0_11 = arith.constant 0 : index
    %c0_12 = arith.constant 0 : index
    %14 = vector.load %arg5[%c0_10, %c0_11, %c0_12] : memref<4x8x32xf32, #tpu.memory_space<vmem>>, vector<1x8x32xf32>
    %15 = vector.shape_cast %14 : vector<1x8x32xf32> to vector<8x32xf32>
    %16 = vector.shape_cast %13 : vector<8x32xf32> to vector<1x8x32xf32>
    tpu.vector_store %arg5[%c0_10, %c0_11, %c0_12], %16 {strides = array<i32>} : memref<4x8x32xf32, #tpu.memory_space<vmem>>, vector<1x8x32xf32>,
    %17 = vector.extract_strided_slice %6 {offsets = [1, 0, 0], sizes = [1, 8, 32], strides = [1, 1, 1]} : vector<4x8x32xf32> to vector<1x8x32xf32>
    %18 = vector.shape_cast %17 : vector<1x8x32xf32> to vector<8x32xf32>
    %cst_13 = arith.constant dense<0.000000e+00> : vector<8x32xf32>
    %19 = tpu.matmul %0, %18, %cst_13 {dimension_numbers = #tpu.dot_dimension_numbers<[1], [0], [0], [1], [0, 0, 1, 1], [], []>} : vector<8x8xf32>, vector<8x32xf32>, vector<8x32xf32> -> vector<8x32xf32>
    %20 = vector.broadcast %2 : vector<1x32xf32> to vector<8x32xf32>
    %21 = arith.addf %19, %20 : vector<8x32xf32>
    %cst_14 = arith.constant 0.000000e+00 : f32
    %22 = vector.broadcast %cst_14 : f32 to vector<8x32xf32>
    %23 = arith.maximumf %21, %22 : vector<8x32xf32>
    %c1 = arith.constant 1 : index
    %c0_15 = arith.constant 0 : index
    %c0_16 = arith.constant 0 : index
    %24 = vector.load %arg5[%c1, %c0_15, %c0_16] : memref<4x8x32xf32, #tpu.memory_space<vmem>>, vector<1x8x32xf32>
    %25 = vector.shape_cast %24 : vector<1x8x32xf32> to vector<8x32xf32>
    %26 = vector.shape_cast %23 : vector<8x32xf32> to vector<1x8x32xf32>
    tpu.vector_store %arg5[%c1, %c0_15, %c0_16], %26 {strides = array<i32>} : memref<4x8x32xf32, #tpu.memory_space<vmem>>, vector<1x8x32xf32>,
    %27 = vector.extract_strided_slice %6 {offsets = [2, 0, 0], sizes = [1, 8, 32], strides = [1, 1, 1]} : vector<4x8x32xf32> to vector<1x8x32xf32>
    %28 = vector.shape_cast %27 : vector<1x8x32xf32> to vector<8x32xf32>
    %cst_17 = arith.constant dense<0.000000e+00> : vector<8x32xf32>
    %29 = tpu.matmul %0, %28, %cst_17 {dimension_numbers = #tpu.dot_dimension_numbers<[1], [0], [0], [1], [0, 0, 1, 1], [], []>} : vector<8x8xf32>, vector<8x32xf32>, vector<8x32xf32> -> vector<8x32xf32>
    %30 = vector.broadcast %2 : vector<1x32xf32> to vector<8x32xf32>
    %31 = arith.addf %29, %30 : vector<8x32xf32>
    %cst_18 = arith.constant 0.000000e+00 : f32
    %32 = vector.broadcast %cst_18 : f32 to vector<8x32xf32>
    %33 = arith.maximumf %31, %32 : vector<8x32xf32>
    %c2 = arith.constant 2 : index
    %c0_19 = arith.constant 0 : index
    %c0_20 = arith.constant 0 : index
    %34 = vector.load %arg5[%c2, %c0_19, %c0_20] : memref<4x8x32xf32, #tpu.memory_space<vmem>>, vector<1x8x32xf32>
    %35 = vector.shape_cast %34 : vector<1x8x32xf32> to vector<8x32xf32>
    %36 = vector.shape_cast %33 : vector<8x32xf32> to vector<1x8x32xf32>
    tpu.vector_store %arg5[%c2, %c0_19, %c0_20], %36 {strides = array<i32>} : memref<4x8x32xf32, #tpu.memory_space<vmem>>, vector<1x8x32xf32>,
    %37 = vector.extract_strided_slice %6 {offsets = [3, 0, 0], sizes = [1, 8, 32], strides = [1, 1, 1]} : vector<4x8x32xf32> to vector<1x8x32xf32>
    %38 = vector.shape_cast %37 : vector<1x8x32xf32> to vector<8x32xf32>
    %cst_21 = arith.constant dense<0.000000e+00> : vector<8x32xf32>
    %39 = tpu.matmul %0, %38, %cst_21 {dimension_numbers = #tpu.dot_dimension_numbers<[1], [0], [0], [1], [0, 0, 1, 1], [], []>} : vector<8x8xf32>, vector<8x32xf32>, vector<8x32xf32> -> vector<8x32xf32>
    %40 = vector.broadcast %2 : vector<1x32xf32> to vector<8x32xf32>
    %41 = arith.addf %39, %40 : vector<8x32xf32>
    %cst_22 = arith.constant 0.000000e+00 : f32
    %42 = vector.broadcast %cst_22 : f32 to vector<8x32xf32>
    %43 = arith.maximumf %41, %42 : vector<8x32xf32>
    %c3 = arith.constant 3 : index
    %c0_23 = arith.constant 0 : index
    %c0_24 = arith.constant 0 : index
    %44 = vector.load %arg5[%c3, %c0_23, %c0_24] : memref<4x8x32xf32, #tpu.memory_space<vmem>>, vector<1x8x32xf32>
    %45 = vector.shape_cast %44 : vector<1x8x32xf32> to vector<8x32xf32>
    %46 = vector.shape_cast %43 : vector<8x32xf32> to vector<1x8x32xf32>
    tpu.vector_store %arg5[%c3, %c0_23, %c0_24], %46 {strides = array<i32>} : memref<4x8x32xf32, #tpu.memory_space<vmem>>, vector<1x8x32xf32>,
    return
  }
  func.func @transform_0(%arg0: i32) -> (i32, i32) {
    %c0_i32 = arith.constant 0 : i32
    %c0_i32_0 = arith.constant 0 : i32
    %c0_i32_1 = arith.constant 0 : i32
    return %c0_i32, %c0_i32_0 : i32, i32
  }
  func.func @transform_1(%arg0: i32) -> (i32, i32, i32) {
    %c0_i32 = arith.constant 0 : i32
    %c0_i32_0 = arith.constant 0 : i32
    %c0_i32_1 = arith.constant 0 : i32
    return %arg0, %c0_i32, %c0_i32_0 : i32, i32, i32
  }
  func.func @transform_2(%arg0: i32) -> (i32, i32) {
    %c0_i32 = arith.constant 0 : i32
    %c0_i32_0 = arith.constant 0 : i32
    %c0_i32_1 = arith.constant 0 : i32
    return %c0_i32, %c0_i32_0 : i32, i32
  }
  func.func @transform_3(%arg0: i32) -> (i32, i32) {
    %c0_i32 = arith.constant 0 : i32
    %c0_i32_0 = arith.constant 0 : i32
    %c0_i32_1 = arith.constant 0 : i32
    return %c0_i32, %c0_i32_0 : i32, i32
  }
  func.func @transform_4(%arg0: i32) -> (i32, i32, i32) {
    %c0_i32 = arith.constant 0 : i32
    %c0_i32_0 = arith.constant 0 : i32
    %c0_i32_1 = arith.constant 0 : i32
    return %arg0, %c0_i32, %c0_i32_0 : i32, i32, i32
  }
}

</mosaic_0001>

<llo_original>
// kernel: tpu_custom_call.1
$region0: #{tpu_custom_call.1}
  #allocation0 [shape = 'u32[]', space=smem, size = 0x4, offset = 0x4, fixed_abs, tag = 'smem constant byte address 0x4 - core index']
  #allocation1 [shape = 'u32[144,128]{1,0:T(1,128)}', space=vmem, size = 0x12000, scoped, tag = 'internal scratch']
  %s0 = inlined_call_operand.hbm [shape: f32[8,8], index: 0, kind: input, shape index: {}]
  %s1 = inlined_call_operand.hbm [shape: f32[4,8,16], index: 1, kind: input, shape index: {}]
  %s2 = inlined_call_operand.hbm [shape: f32[16,32], index: 2, kind: input, shape index: {}]
  %s3 = inlined_call_operand.vmem [shape: f32[1,32], index: 3, kind: input, shape index: {}]
  %s4 = inlined_call_operand.hbm [shape: f32[4,8,32], index: 4, kind: output, shape index: {}]
  %s5 = sld [smem:[#allocation0]]
  $region38: #{tpu_custom_call.1} parent=0
    _
  %s7 = ssub.s32 1, %s5
  %s8 = scalar_select 0, %s7, %s5
  $region1: #{tpu_custom_call.1} parent=0
    #allocation2 [shape = 'u8[4096]{0}', space=vmem, size = 0x1000, scoped, tag = 'input window, operand 0, single buffered']
    #allocation3 [shape = 's32[1]{0}', space=sflag, size = 0x4, scoped, tag = 'scoped memory for tpu_custom_call.1']
    #allocation4 [shape = 's32[1]{0}', space=sflag, size = 0x4, scoped, tag = 'scoped memory for tpu_custom_call.1']
    #allocation5 [shape = 'u8[16384]{0}', space=vmem, size = 0x4000, scoped, tag = 'input window, operand 1, single buffered']
    #allocation6 [shape = 's32[1]{0}', space=sflag, size = 0x4, scoped, tag = 'scoped memory for tpu_custom_call.1']
    #allocation7 [shape = 'u8[8192]{0}', space=vmem, size = 0x2000, scoped, tag = 'input window, operand 2, single buffered']
    #allocation8 [shape = 'u8[16384]{0}', space=vmem, size = 0x4000, scoped, tag = 'output window, operand 0, single buffered']
    %9 = vsyncpa [#allocation3], 0
    %10 = vsyncpa [#allocation6], 0
    %11 = vsyncpa [#allocation4], 0
    // Predicated region
    $region2: #{tpu_custom_call.1} parent=1 // pred_check
      _
    $region3: #{tpu_custom_call.1} parent=1 // pred_check_branch
      %13 = sbr.rel (0) target = $region5
    $region4: #{tpu_custom_call.1} parent=1 // pred_region
      %s15 = ssub.s32 128, 128
      %16 = vsyncadd [#allocation3], %s15
      %s18 = sshll.u32 [#allocation2], 4
      %s19 = int_to_ptr.vmem [resolvable:$true] %s18
      %21 = dma.hbm_to_vmem [thread:$0]  %s0, 128, %s19, [#allocation3]
    $region5: #{tpu_custom_call.1} parent=1 // pred_fallthru
      _
    // Predicated region
    $region6: #{tpu_custom_call.1} parent=1 // pred_check
      _
    $region7: #{tpu_custom_call.1} parent=1 // pred_check_branch
      %23 = sbr.rel (0) target = $region9
    $region8: #{tpu_custom_call.1} parent=1 // pred_region
      %s25 = ssub.s32 512, 512
      %26 = vsyncadd [#allocation6], %s25
      %s27 = sshll.u32 [#allocation5], 4
      %s28 = int_to_ptr.vmem [resolvable:$true] %s27
      %33 = dma.hbm_to_vmem [thread:$0]  %s1, 512, %s28, [#allocation6], 128, 128, 8
    $region9: #{tpu_custom_call.1} parent=1 // pred_fallthru
      _
    // Predicated region
    $region10: #{tpu_custom_call.1} parent=1 // pred_check
      _
    $region11: #{tpu_custom_call.1} parent=1 // pred_check_branch
      %35 = sbr.rel (0) target = $region13
    $region12: #{tpu_custom_call.1} parent=1 // pred_region
      %s37 = ssub.s32 256, 256
      %38 = vsyncadd [#allocation6], %s37
      %s39 = sshll.u32 [#allocation7], 4
      %s40 = int_to_ptr.vmem [resolvable:$true] %s39
      %45 = dma.hbm_to_vmem [thread:$0]  %s2, 256, %s40, [#allocation6], 128, 128, 8
    $region13: #{tpu_custom_call.1} parent=1 // pred_fallthru
      _
    // Predicated region
    $region14: #{tpu_custom_call.1} parent=1 // pred_check
      _
    $region15: #{tpu_custom_call.1} parent=1 // pred_check_branch
      %47 = sbr.rel (0) target = $region17
    $region16: #{tpu_custom_call.1} parent=1 // pred_region
      _
    $region17: #{tpu_custom_call.1} parent=1 // pred_fallthru
      _
    // Predicated region
    $region18: #{tpu_custom_call.1} parent=1 // pred_check
      _
    $region19: #{tpu_custom_call.1} parent=1 // pred_check_branch
      %49 = sbr.rel (0) target = $region21
    $region20: #{tpu_custom_call.1} parent=1 // pred_region
      %50 = dma.done [#allocation3], 128
    $region21: #{tpu_custom_call.1} parent=1 // pred_fallthru
      _
    // Predicated region
    $region22: #{tpu_custom_call.1} parent=1 // pred_check
      _
    $region23: #{tpu_custom_call.1} parent=1 // pred_check_branch
      %52 = sbr.rel (0) target = $region25
    $region24: #{tpu_custom_call.1} parent=1 // pred_region
      %53 = dma.done [#allocation6], 512
    $region25: #{tpu_custom_call.1} parent=1 // pred_fallthru
      _
    // Predicated region
    $region26: #{tpu_custom_call.1} parent=1 // pred_check
      _
    $region27: #{tpu_custom_call.1} parent=1 // pred_check_branch
      %55 = sbr.rel (0) target = $region29
    $region28: #{tpu_custom_call.1} parent=1 // pred_region
      %56 = dma.done [#allocation6], 256
    $region29: #{tpu_custom_call.1} parent=1 // pred_fallthru
      _
    %v57 = vld [vmem:[#allocation2] sm:$0xff]
    %v58 = vld [vmem:[#allocation7] sm:$0xff]
    %v59 = vld [vmem:[#allocation7 + $0x8] sm:$0xff]
    %v60 = vld [vmem:[%s3] sm:$0x1]
    %v61 = vld [vmem:[#allocation5] sm:$0xff]
    %v62 = vld [vmem:[#allocation5 + $0x8] sm:$0xff]
    %v63 = vld [vmem:[#allocation5 + $0x10] sm:$0xff]
    %v64 = vld [vmem:[#allocation5 + $0x18] sm:$0xff]
    %vm65 = vcmask 130048
    %v67 = vsel %vm65, %v61, 0
    %v70 = vsel %vm65, %v62, 0
    %v73 = vsel %vm65, %v63, 0
    %v76 = vsel %vm65, %v64, 0
    %78 = vmatprep.subr.mxu0 0.0
    %79 = vmatpush1.msra.mxu0 0.0
    %80 = vmatprep.subr.mxu0 0.0
    %81 = vmatpush1.msra.mxu0 0.0
    %82 = vmatprep.subr.mxu0 0.0
    %83 = vmatpush1.msra.mxu0 0.0
    %84 = vmatprep.subr.mxu0 0.0
    %85 = vmatpush1.msra.mxu0 0.0
    %86 = vmatprep.subr.mxu0 0.0
    %87 = vmatpush1.msra.mxu0 0.0
    %88 = vmatprep.subr.mxu0 0.0
    %89 = vmatpush1.msra.mxu0 0.0
    %90 = vmatprep.subr.mxu0 0.0
    %91 = vmatpush1.msra.mxu0 0.0
    %92 = vmatprep.subr.mxu0 0.0
    %93 = vmatpush1.msra.mxu0 0.0
    %94 = vmatprep.subr.mxu0 0.0
    %95 = vmatpush1.msra.mxu0 0.0
    %96 = vmatprep.subr.mxu0 0.0
    %97 = vmatpush1.msra.mxu0 0.0
    %98 = vmatprep.subr.mxu0 0.0
    %99 = vmatpush1.msra.mxu0 0.0
    %100 = vmatprep.subr.mxu0 0.0
    %101 = vmatpush1.msra.mxu0 0.0
    %102 = vmatprep.subr.mxu0 0.0
    %103 = vmatpush1.msra.mxu0 0.0
    %104 = vmatprep.subr.mxu0 0.0
    %105 = vmatpush1.msra.mxu0 0.0
    %106 = vmatprep.subr.mxu0 0.0
    %107 = vmatpush1.msra.mxu0 %v59
    %108 = vmatprep.subr.mxu0 0.0
    %109 = vmatpush1.msra.mxu0 %v58
    %110 = vmatprep.subr.mxu0 0.0
    %111 = vmatpush2.msra.mxu0 0.0
    %112 = vmatprep.subr.mxu0 0.0
    %113 = vmatpush2.msra.mxu0 0.0
    %114 = vmatprep.subr.mxu0 0.0
    %115 = vmatpush2.msra.mxu0 0.0
    %116 = vmatprep.subr.mxu0 0.0
    %117 = vmatpush2.msra.mxu0 0.0
    %118 = vmatprep.subr.mxu0 0.0
    %119 = vmatpush2.msra.mxu0 0.0
    %120 = vmatprep.subr.mxu0 0.0
    %121 = vmatpush2.msra.mxu0 0.0
    %122 = vmatprep.subr.mxu0 0.0
    %123 = vmatpush2.msra.mxu0 0.0
    %124 = vmatprep.subr.mxu0 0.0
    %125 = vmatpush2.msra.mxu0 0.0
    %126 = vmatprep.subr.mxu0 0.0
    %127 = vmatpush2.msra.mxu0 0.0
    %128 = vmatprep.subr.mxu0 0.0
    %129 = vmatpush2.msra.mxu0 0.0
    %130 = vmatprep.subr.mxu0 0.0
    %131 = vmatpush2.msra.mxu0 0.0
    %132 = vmatprep.subr.mxu0 0.0
    %133 = vmatpush2.msra.mxu0 0.0
    %134 = vmatprep.subr.mxu0 0.0
    %135 = vmatpush2.msra.mxu0 0.0
    %136 = vmatprep.subr.mxu0 0.0
    %137 = vmatpush2.msra.mxu0 0.0
    %138 = vmatprep.subr.mxu0 0.0
    %139 = vmatpush2.msra.mxu0 0.0
    %140 = vmatprep.subr.mxu0 0.0
    %141 = vmatpush2.msra.mxu0 0.0
    %142 = vmatprep.mubr.f32.mxu0 0.0
    %143 = vmatmul.mubr.f32.gmra.mxu0 %v67
    %v144 = vpop.f32.mrf.mxu0
    %v145 = vadd.f32 0.0, %v144
    %v146 = vpop.f32.mrf.mxu0
    %147 = vmatprep.mubr.f32.mxu0 0.0
    %148 = vmatmul.mubr.f32.gmra.mxu0 %v70
    %v149 = vpop.f32.mrf.mxu0
    %v150 = vadd.f32 0.0, %v149
    %v151 = vpop.f32.mrf.mxu0
    %152 = vmatprep.mubr.f32.mxu0 0.0
    %153 = vmatmul.mubr.f32.gmra.mxu0 %v73
    %v154 = vpop.f32.mrf.mxu0
    %v155 = vadd.f32 0.0, %v154
    %v156 = vpop.f32.mrf.mxu0
    %157 = vmatprep.mubr.f32.mxu0 0.0
    %158 = vmatmul.mubr.f32.gmra.mxu0 %v76
    %v159 = vpop.f32.mrf.mxu0
    %v160 = vadd.f32 0.0, %v159
    %v161 = vpop.f32.mrf.mxu0
    %162 = vdwg.mxu0
    %v164 = vlaneseq
    %v165 = vshrl.u32 %v164, 7
    %v166 = vsub.s32 0, %v165
    %v167 = vrot.slane %v60, %v166
    %vm169 = vcmask 64512
    %v171 = vsel %vm169, %v57, 0
    %173 = vmatprep.subr.mxu0 0.0
    %174 = vmatpush1.msra.mxu0 0.0
    %175 = vmatprep.subr.mxu0 0.0
    %176 = vmatpush1.msra.mxu0 0.0
    %177 = vmatprep.subr.mxu0 0.0
    %178 = vmatpush1.msra.mxu0 0.0
    %179 = vmatprep.subr.mxu0 0.0
    %180 = vmatpush1.msra.mxu0 0.0
    %181 = vmatprep.subr.mxu0 0.0
    %182 = vmatpush1.msra.mxu0 0.0
    %183 = vmatprep.subr.mxu0 0.0
    %184 = vmatpush1.msra.mxu0 0.0
    %185 = vmatprep.subr.mxu0 0.0
    %186 = vmatpush1.msra.mxu0 0.0
    %187 = vmatprep.subr.mxu0 0.0
    %188 = vmatpush1.msra.mxu0 0.0
    %189 = vmatprep.subr.mxu0 0.0
    %190 = vmatpush1.msra.mxu0 0.0
    %191 = vmatprep.subr.mxu0 0.0
    %192 = vmatpush1.msra.mxu0 0.0
    %193 = vmatprep.subr.mxu0 0.0
    %194 = vmatpush1.msra.mxu0 0.0
    %195 = vmatprep.subr.mxu0 0.0
    %196 = vmatpush1.msra.mxu0 0.0
    %197 = vmatprep.subr.mxu0 0.0
    %198 = vmatpush1.msra.mxu0 0.0
    %199 = vmatprep.subr.mxu0 0.0
    %200 = vmatpush1.msra.mxu0 0.0
    %201 = vmatprep.subr.mxu0 0.0
    %202 = vmatpush1.msra.mxu0 0.0
    %203 = vmatprep.subr.mxu0 0.0
    %204 = vmatpush1.msra.mxu0 %v145
    %205 = vmatprep.subr.mxu0 0.0
    %206 = vmatpush2.msra.mxu0 0.0
    %207 = vmatprep.subr.mxu0 0.0
    %208 = vmatpush2.msra.mxu0 0.0
    %209 = vmatprep.subr.mxu0 0.0
    %210 = vmatpush2.msra.mxu0 0.0
    %211 = vmatprep.subr.mxu0 0.0
    %212 = vmatpush2.msra.mxu0 0.0
    %213 = vmatprep.subr.mxu0 0.0
    %214 = vmatpush2.msra.mxu0 0.0
    %215 = vmatprep.subr.mxu0 0.0
    %216 = vmatpush2.msra.mxu0 0.0
    %217 = vmatprep.subr.mxu0 0.0
    %218 = vmatpush2.msra.mxu0 0.0
    %219 = vmatprep.subr.mxu0 0.0
    %220 = vmatpush2.msra.mxu0 0.0
    %221 = vmatprep.subr.mxu0 0.0
    %222 = vmatpush2.msra.mxu0 0.0
    %223 = vmatprep.subr.mxu0 0.0
    %224 = vmatpush2.msra.mxu0 0.0
    %225 = vmatprep.subr.mxu0 0.0
    %226 = vmatpush2.msra.mxu0 0.0
    %227 = vmatprep.subr.mxu0 0.0
    %228 = vmatpush2.msra.mxu0 0.0
    %229 = vmatprep.subr.mxu0 0.0
    %230 = vmatpush2.msra.mxu0 0.0
    %231 = vmatprep.subr.mxu0 0.0
    %232 = vmatpush2.msra.mxu0 0.0
    %233 = vmatprep.subr.mxu0 0.0
    %234 = vmatpush2.msra.mxu0 0.0
    %235 = vmatprep.subr.mxu0 0.0
    %236 = vmatpush2.msra.mxu0 0.0
    %237 = vmatprep.mubr.f32.mxu0 0.0
    %238 = vmatmul.mubr.f32.gmra.mxu0 %v171
    %v239 = vpop.f32.mrf.mxu0
    %v240 = vadd.f32 %v167, %v239
    %v241 = vpop.f32.mrf.mxu0
    %242 = vdwg.mxu0
    %v243 = vmax.f32 %v240, 0.0
    %vm244 = vcmask 261120
    %245 = vst.msk [vmem:[#allocation8] sm:$0xff] %vm244, %v243
    %246 = vmatprep.subr.mxu0 0.0
    %247 = vmatpush1.msra.mxu0 0.0
    %248 = vmatprep.subr.mxu0 0.0
    %249 = vmatpush1.msra.mxu0 0.0
    %250 = vmatprep.subr.mxu0 0.0
    %251 = vmatpush1.msra.mxu0 0.0
    %252 = vmatprep.subr.mxu0 0.0
    %253 = vmatpush1.msra.mxu0 0.0
    %254 = vmatprep.subr.mxu0 0.0
    %255 = vmatpush1.msra.mxu0 0.0
    %256 = vmatprep.subr.mxu0 0.0
    %257 = vmatpush1.msra.mxu0 0.0
    %258 = vmatprep.subr.mxu0 0.0
    %259 = vmatpush1.msra.mxu0 0.0
    %260 = vmatprep.subr.mxu0 0.0
    %261 = vmatpush1.msra.mxu0 0.0
    %262 = vmatprep.subr.mxu0 0.0
    %263 = vmatpush1.msra.mxu0 0.0
    %264 = vmatprep.subr.mxu0 0.0
    %265 = vmatpush1.msra.mxu0 0.0
    %266 = vmatprep.subr.mxu0 0.0
    %267 = vmatpush1.msra.mxu0 0.0
    %268 = vmatprep.subr.mxu0 0.0
    %269 = vmatpush1.msra.mxu0 0.0
    %270 = vmatprep.subr.mxu0 0.0
    %271 = vmatpush1.msra.mxu0 0.0
    %272 = vmatprep.subr.mxu0 0.0
    %273 = vmatpush1.msra.mxu0 0.0
    %274 = vmatprep.subr.mxu0 0.0
    %275 = vmatpush1.msra.mxu0 0.0
    %276 = vmatprep.subr.mxu0 0.0
    %277 = vmatpush1.msra.mxu0 %v150
    %278 = vmatprep.subr.mxu0 0.0
    %279 = vmatpush2.msra.mxu0 0.0
    %280 = vmatprep.subr.mxu0 0.0
    %281 = vmatpush2.msra.mxu0 0.0
    %282 = vmatprep.subr.mxu0 0.0
    %283 = vmatpush2.msra.mxu0 0.0
    %284 = vmatprep.subr.mxu0 0.0
    %285 = vmatpush2.msra.mxu0 0.0
    %286 = vmatprep.subr.mxu0 0.0
    %287 = vmatpush2.msra.mxu0 0.0
    %288 = vmatprep.subr.mxu0 0.0
    %289 = vmatpush2.msra.mxu0 0.0
    %290 = vmatprep.subr.mxu0 0.0
    %291 = vmatpush2.msra.mxu0 0.0
    %292 = vmatprep.subr.mxu0 0.0
    %293 = vmatpush2.msra.mxu0 0.0
    %294 = vmatprep.subr.mxu0 0.0
    %295 = vmatpush2.msra.mxu0 0.0
    %296 = vmatprep.subr.mxu0 0.0
    %297 = vmatpush2.msra.mxu0 0.0
    %298 = vmatprep.subr.mxu0 0.0
    %299 = vmatpush2.msra.mxu0 0.0
    %300 = vmatprep.subr.mxu0 0.0
    %301 = vmatpush2.msra.mxu0 0.0
    %302 = vmatprep.subr.mxu0 0.0
    %303 = vmatpush2.msra.mxu0 0.0
    %304 = vmatprep.subr.mxu0 0.0
    %305 = vmatpush2.msra.mxu0 0.0
    %306 = vmatprep.subr.mxu0 0.0
    %307 = vmatpush2.msra.mxu0 0.0
    %308 = vmatprep.subr.mxu0 0.0
    %309 = vmatpush2.msra.mxu0 0.0
    %310 = vmatprep.mubr.f32.mxu0 0.0
    %311 = vmatmul.mubr.f32.gmra.mxu0 %v171
    %v312 = vpop.f32.mrf.mxu0
    %v313 = vadd.f32 %v167, %v312
    %v314 = vpop.f32.mrf.mxu0
    %315 = vdwg.mxu0
    %v316 = vmax.f32 %v313, 0.0
    %s317 = scalar_lea.vmem [#allocation8], 8
    %318 = vst.msk [vmem:[%s317] sm:$0xff] %vm244, %v316
    %319 = vmatprep.subr.mxu0 0.0
    %320 = vmatpush1.msra.mxu0 0.0
    %321 = vmatprep.subr.mxu0 0.0
    %322 = vmatpush1.msra.mxu0 0.0
    %323 = vmatprep.subr.mxu0 0.0
    %324 = vmatpush1.msra.mxu0 0.0
    %325 = vmatprep.subr.mxu0 0.0
    %326 = vmatpush1.msra.mxu0 0.0
    %327 = vmatprep.subr.mxu0 0.0
    %328 = vmatpush1.msra.mxu0 0.0
    %329 = vmatprep.subr.mxu0 0.0
    %330 = vmatpush1.msra.mxu0 0.0
    %331 = vmatprep.subr.mxu0 0.0
    %332 = vmatpush1.msra.mxu0 0.0
    %333 = vmatprep.subr.mxu0 0.0
    %334 = vmatpush1.msra.mxu0 0.0
    %335 = vmatprep.subr.mxu0 0.0
    %336 = vmatpush1.msra.mxu0 0.0
    %337 = vmatprep.subr.mxu0 0.0
    %338 = vmatpush1.msra.mxu0 0.0
    %339 = vmatprep.subr.mxu0 0.0
    %340 = vmatpush1.msra.mxu0 0.0
    %341 = vmatprep.subr.mxu0 0.0
    %342 = vmatpush1.msra.mxu0 0.0
    %343 = vmatprep.subr.mxu0 0.0
    %344 = vmatpush1.msra.mxu0 0.0
    %345 = vmatprep.subr.mxu0 0.0
    %346 = vmatpush1.msra.mxu0 0.0
    %347 = vmatprep.subr.mxu0 0.0
    %348 = vmatpush1.msra.mxu0 0.0
    %349 = vmatprep.subr.mxu0 0.0
    %350 = vmatpush1.msra.mxu0 %v155
    %351 = vmatprep.subr.mxu0 0.0
    %352 = vmatpush2.msra.mxu0 0.0
    %353 = vmatprep.subr.mxu0 0.0
    %354 = vmatpush2.msra.mxu0 0.0
    %355 = vmatprep.subr.mxu0 0.0
    %356 = vmatpush2.msra.mxu0 0.0
    %357 = vmatprep.subr.mxu0 0.0
    %358 = vmatpush2.msra.mxu0 0.0
    %359 = vmatprep.subr.mxu0 0.0
    %360 = vmatpush2.msra.mxu0 0.0
    %361 = vmatprep.subr.mxu0 0.0
    %362 = vmatpush2.msra.mxu0 0.0
    %363 = vmatprep.subr.mxu0 0.0
    %364 = vmatpush2.msra.mxu0 0.0
    %365 = vmatprep.subr.mxu0 0.0
    %366 = vmatpush2.msra.mxu0 0.0
    %367 = vmatprep.subr.mxu0 0.0
    %368 = vmatpush2.msra.mxu0 0.0
    %369 = vmatprep.subr.mxu0 0.0
    %370 = vmatpush2.msra.mxu0 0.0
    %371 = vmatprep.subr.mxu0 0.0
    %372 = vmatpush2.msra.mxu0 0.0
    %373 = vmatprep.subr.mxu0 0.0
    %374 = vmatpush2.msra.mxu0 0.0
    %375 = vmatprep.subr.mxu0 0.0
    %376 = vmatpush2.msra.mxu0 0.0
    %377 = vmatprep.subr.mxu0 0.0
    %378 = vmatpush2.msra.mxu0 0.0
    %379 = vmatprep.subr.mxu0 0.0
    %380 = vmatpush2.msra.mxu0 0.0
    %381 = vmatprep.subr.mxu0 0.0
    %382 = vmatpush2.msra.mxu0 0.0
    %383 = vmatprep.mubr.f32.mxu0 0.0
    %384 = vmatmul.mubr.f32.gmra.mxu0 %v171
    %v385 = vpop.f32.mrf.mxu0
    %v386 = vadd.f32 %v167, %v385
    %v387 = vpop.f32.mrf.mxu0
    %388 = vdwg.mxu0
    %v389 = vmax.f32 %v386, 0.0
    %s390 = scalar_lea.vmem [#allocation8], 16
    %391 = vst.msk [vmem:[%s390] sm:$0xff] %vm244, %v389
    %392 = vmatprep.subr.mxu0 0.0
    %393 = vmatpush1.msra.mxu0 0.0
    %394 = vmatprep.subr.mxu0 0.0
    %395 = vmatpush1.msra.mxu0 0.0
    %396 = vmatprep.subr.mxu0 0.0
    %397 = vmatpush1.msra.mxu0 0.0
    %398 = vmatprep.subr.mxu0 0.0
    %399 = vmatpush1.msra.mxu0 0.0
    %400 = vmatprep.subr.mxu0 0.0
    %401 = vmatpush1.msra.mxu0 0.0
    %402 = vmatprep.subr.mxu0 0.0
    %403 = vmatpush1.msra.mxu0 0.0
    %404 = vmatprep.subr.mxu0 0.0
    %405 = vmatpush1.msra.mxu0 0.0
    %406 = vmatprep.subr.mxu0 0.0
    %407 = vmatpush1.msra.mxu0 0.0
    %408 = vmatprep.subr.mxu0 0.0
    %409 = vmatpush1.msra.mxu0 0.0
    %410 = vmatprep.subr.mxu0 0.0
    %411 = vmatpush1.msra.mxu0 0.0
    %412 = vmatprep.subr.mxu0 0.0
    %413 = vmatpush1.msra.mxu0 0.0
    %414 = vmatprep.subr.mxu0 0.0
    %415 = vmatpush1.msra.mxu0 0.0
    %416 = vmatprep.subr.mxu0 0.0
    %417 = vmatpush1.msra.mxu0 0.0
    %418 = vmatprep.subr.mxu0 0.0
    %419 = vmatpush1.msra.mxu0 0.0
    %420 = vmatprep.subr.mxu0 0.0
    %421 = vmatpush1.msra.mxu0 0.0
    %422 = vmatprep.subr.mxu0 0.0
    %423 = vmatpush1.msra.mxu0 %v160
    %424 = vmatprep.subr.mxu0 0.0
    %425 = vmatpush2.msra.mxu0 0.0
    %426 = vmatprep.subr.mxu0 0.0
    %427 = vmatpush2.msra.mxu0 0.0
    %428 = vmatprep.subr.mxu0 0.0
    %429 = vmatpush2.msra.mxu0 0.0
    %430 = vmatprep.subr.mxu0 0.0
    %431 = vmatpush2.msra.mxu0 0.0
    %432 = vmatprep.subr.mxu0 0.0
    %433 = vmatpush2.msra.mxu0 0.0
    %434 = vmatprep.subr.mxu0 0.0
    %435 = vmatpush2.msra.mxu0 0.0
    %436 = vmatprep.subr.mxu0 0.0
    %437 = vmatpush2.msra.mxu0 0.0
    %438 = vmatprep.subr.mxu0 0.0
    %439 = vmatpush2.msra.mxu0 0.0
    %440 = vmatprep.subr.mxu0 0.0
    %441 = vmatpush2.msra.mxu0 0.0
    %442 = vmatprep.subr.mxu0 0.0
    %443 = vmatpush2.msra.mxu0 0.0
    %444 = vmatprep.subr.mxu0 0.0
    %445 = vmatpush2.msra.mxu0 0.0
    %446 = vmatprep.subr.mxu0 0.0
    %447 = vmatpush2.msra.mxu0 0.0
    %448 = vmatprep.subr.mxu0 0.0
    %449 = vmatpush2.msra.mxu0 0.0
    %450 = vmatprep.subr.mxu0 0.0
    %451 = vmatpush2.msra.mxu0 0.0
    %452 = vmatprep.subr.mxu0 0.0
    %453 = vmatpush2.msra.mxu0 0.0
    %454 = vmatprep.subr.mxu0 0.0
    %455 = vmatpush2.msra.mxu0 0.0
    %456 = vmatprep.mubr.f32.mxu0 0.0
    %457 = vmatmul.mubr.f32.gmra.mxu0 %v171
    %v458 = vpop.f32.mrf.mxu0
    %v459 = vadd.f32 %v167, %v458
    %v460 = vpop.f32.mrf.mxu0
    %461 = vdwg.mxu0
    %v462 = vmax.f32 %v459, 0.0
    %s463 = scalar_lea.vmem [#allocation8], 24
    %464 = vst.msk [vmem:[%s463] sm:$0xff] %vm244, %v462
    // Predicated region
    $region30: #{tpu_custom_call.1} parent=1 // pred_check
      _
    $region31: #{tpu_custom_call.1} parent=1 // pred_check_branch
      %466 = sbr.rel (0) target = $region33
    $region32: #{tpu_custom_call.1} parent=1 // pred_region
      %s468 = ssub.s32 512, 512
      %469 = vsyncadd [#allocation4], %s468
      %s470 = sshll.u32 [#allocation8], 4
      %s471 = int_to_ptr.vmem [resolvable:$true] %s470
      %476 = dma.vmem_to_hbm [thread:$0]  %s471, 512, %s4, [#allocation4], 128, 128, 8
    $region33: #{tpu_custom_call.1} parent=1 // pred_fallthru
      _
    // Predicated region
    $region34: #{tpu_custom_call.1} parent=1 // pred_check
      _
    $region35: #{tpu_custom_call.1} parent=1 // pred_check_branch
      %478 = sbr.rel (0) target = $region37
    $region36: #{tpu_custom_call.1} parent=1 // pred_region
      %479 = dma.done [#allocation4], 512
    $region37: #{tpu_custom_call.1} parent=1 // pred_fallthru
      _
    %480 = vsyncpa [#allocation3], 1
    %481 = vsyncpa [#allocation6], 1
    %482 = vsyncpa [#allocation4], 1

</llo_original>
